<compile_context>
chip_gen: v6e
topology: v6e:2x2x1
jax: 0.10.0
libtpu: 0.0.40
codegen_flags: <defaults>
</compile_context>

<pallas_src>
import functools

import jax
import jax.numpy as jnp
from jax import lax
from jax.experimental import pallas as pl
from jax.experimental.pallas import tpu as pltpu

LANES = 128
SUBLANES = 8
MAX_TILE_ROWS = 1024  # (1024, 128) f32 tile = 512 KiB per pipeline buffer.


def _component_partials_kernel(tile_rows, inner_steps, total_rows, needs_mask,
                               pred_ref, tgt_ref, part_ref):
    """Grid (P, inner): p slices the row-block range, i walks blocks in a slice.

    pred_ref/tgt_ref : VMEM (tile_rows, 128) tiles in native dtype (upcast here).
    part_ref         : VMEM (2, 8, 128) f32 partial sums for slice p, resident
                       across the inner ("arbitrary") axis.
                       part_ref[0] = running sum of squared diff
                       part_ref[1] = running sum of abs diff
    """
    p = pl.program_id(0)
    i = pl.program_id(1)

    @pl.when(i == 0)
    def _init():
        part_ref[...] = jnp.zeros_like(part_ref)

    d = pred_ref[...].astype(jnp.float32) - tgt_ref[...].astype(jnp.float32)

    if needs_mask:
        # Logical (unclamped) block index: rows at/after `total_rows` are either
        # boundary-block garbage or duplicated data from a clamped index_map;
        # zero them with a select so NaN garbage cannot propagate.
        row0 = (p * inner_steps + i) * tile_rows
        rid = row0 + lax.broadcasted_iota(jnp.int32, d.shape, 0)
        d = jnp.where(rid < total_rows, d, 0.0)

    # Fold the tile to an (8, 128) vreg-shaped partial: sum over the leading
    # axis only -> pure VPU adds, no per-step cross-lane (XLU) work.
    d3 = d.reshape(tile_rows // SUBLANES, SUBLANES, LANES)
    part_ref[0, :, :] += jnp.sum(d3 * d3, axis=0)
    part_ref[1, :, :] += jnp.sum(jnp.abs(d3), axis=0)


def component_loss(output, target, weights, *,
                   max_tile_rows=MAX_TILE_ROWS, num_slices=2):
    """Weighted sum of MSE and L1 losses (full-mean reductions).

    output, target: same shape (e.g. NCHW), any float dtype (streamed natively).
    weights: (2,) component weights.
    Returns a float32 scalar.
    """
    assert output.shape == target.shape
    total_elems = output.size

    # Flatten to a lane-dense (rows, 128) slab in the *native* dtype.
    flat_o = output.reshape(-1)
    flat_t = target.reshape(-1)

    rem = total_elems % LANES
    if rem:
        # TODO(synk): rare fallback (numel not a multiple of 128) — this pad is
        # a full-array copy.  Padded zeros contribute 0 to both partial sums.
        pad = LANES - rem
        flat_o = jnp.pad(flat_o, (0, pad))
        flat_t = jnp.pad(flat_t, (0, pad))

    rows = flat_o.size // LANES
    o2d = flat_o.reshape(rows, LANES)
    t2d = flat_t.reshape(rows, LANES)

    # Tile rows: big (sweep 512/1024/2048), multiple of 8, capped for tiny inputs.
    tile_rows = min(max_tile_rows, ((rows + SUBLANES - 1) // SUBLANES) * SUBLANES)
    nblocks = pl.cdiv(rows, tile_rows)
    num_slices = max(1, min(num_slices, nblocks))   # v7x: 2 TCs; else collapses.
    inner_steps = pl.cdiv(nblocks, num_slices)
    needs_clamp = num_slices * inner_steps > nblocks
    needs_mask = num_slices * inner_steps * tile_rows != rows

    if needs_clamp:
        def in_map(p, i):
            return (jnp.minimum(p * inner_steps + i, nblocks - 1), 0)
    else:
        def in_map(p, i):
            return (p * inner_steps + i, 0)

    kernel = functools.partial(_component_partials_kernel,
                               tile_rows, inner_steps, rows, needs_mask)

    partials = pl.pallas_call(
        kernel,
        out_shape=jax.ShapeDtypeStruct((num_slices * 2, SUBLANES, LANES),
                                       jnp.float32),
        grid_spec=pltpu.PrefetchScalarGridSpec(
            num_scalar_prefetch=0,
            grid=(num_slices, inner_steps),
            in_specs=[
                pl.BlockSpec((tile_rows, LANES), in_map),
                pl.BlockSpec((tile_rows, LANES), in_map),
            ],
            # Per-slice partial block; same block index across the inner
            # (reduction) axis -> resident accumulator, written back per slice.
            out_specs=pl.BlockSpec((2, SUBLANES, LANES), lambda p, i: (p, 0, 0)),
        ),
        compiler_params=pltpu.CompilerParams(
            dimension_semantics=("parallel", "arbitrary"),
        ),
    )(o2d, t2d)

    # Tiny finalize on the (num_slices*2, 8, 128) partials: cross-lane reduce,
    # 1/N mean scale, and the ComponentLoss weighted combine.
    sums = partials.reshape(num_slices, 2, SUBLANES * LANES).sum(axis=(0, 2))
    w = weights.astype(jnp.float32)
    mse = sums[0] / total_elems
    mae = sums[1] / total_elems
    return w[0] * mse + w[1] * mae


if __name__ == "__main__":
    key = jax.random.PRNGKey(0)
    k1, k2 = jax.random.split(key)

    # Small NCHW inputs, per the module's usage (image-style losses).
    output = jax.random.normal(k1, (2, 4, 16, 16), dtype=jnp.float32)
    target = jax.random.normal(k2, (2, 4, 16, 16), dtype=jnp.float32)

    # Deterministic params: ComponentLoss([0.5, 0.5], MSELoss={}, L1Loss={})
    weights = jnp.array([0.5, 0.5], dtype=jnp.float32)

    loss = component_loss(output, target, weights)
    loss = jax.block_until_ready(loss)

    # Pure-JAX reference check.
    diff = output - target
    ref = weights[0] * jnp.mean(diff * diff) + weights[1] * jnp.mean(jnp.abs(diff))
    assert jnp.allclose(loss, ref, rtol=1e-5, atol=1e-6), (loss, ref)

    print("KERNEL_OK")
</pallas_src>

<mosaic_0001>
module attributes {stable_mosaic.version = 11 : i64} {
  func.func @_component_partials_kernel(%arg0: i32, %arg1: i32, %arg2: memref<16x128xf32, #tpu.memory_space<vmem>>, %arg3: memref<16x128xf32, #tpu.memory_space<vmem>>, %arg4: memref<2x8x128xf32, #tpu.memory_space<vmem>>) attributes {dimension_semantics = [#tpu.dimension_semantics<parallel>, #tpu.dimension_semantics<arbitrary>], iteration_bounds = array<i64: 1, 1>, scalar_prefetch = 0 : i64, scratch_operands = 0 : i64, tpu.core_type = #tpu.core_type<tc>, window_params = [{transform_indices = @transform_0, window_bounds = array<i64: 16, 128>}, {transform_indices = @transform_1, window_bounds = array<i64: 16, 128>}, {transform_indices = @transform_2, window_bounds = array<i64: 2, 8, 128>}]} {
    %c0_i32 = arith.constant 0 : i32
    %0 = arith.cmpi eq, %arg1, %c0_i32 : i32
    %1 = arith.extui %0 : i1 to i32
    %c0_i32_0 = arith.constant 0 : i32
    %2 = arith.cmpi ne, %1, %c0_i32_0 : i32
    scf.if %2 {
      %cst_16 = arith.constant 0.000000e+00 : f32
      %23 = vector.broadcast %cst_16 : f32 to vector<2x8x128xf32>
      %c0_17 = arith.constant 0 : index
      %c0_18 = arith.constant 0 : index
      %c0_19 = arith.constant 0 : index
      %24 = vector.load %arg4[%c0_17, %c0_18, %c0_19] : memref<2x8x128xf32, #tpu.memory_space<vmem>>, vector<2x8x128xf32>
      tpu.vector_store %arg4[%c0_17, %c0_18, %c0_19], %23 {strides = array<i32>} : memref<2x8x128xf32, #tpu.memory_space<vmem>>, vector<2x8x128xf32>,
    } else {
    }
    %c0 = arith.constant 0 : index
    %c0_1 = arith.constant 0 : index
    %3 = vector.load %arg2[%c0, %c0_1] : memref<16x128xf32, #tpu.memory_space<vmem>>, vector<16x128xf32>
    %c0_2 = arith.constant 0 : index
    %c0_3 = arith.constant 0 : index
    %4 = vector.load %arg3[%c0_2, %c0_3] : memref<16x128xf32, #tpu.memory_space<vmem>>, vector<16x128xf32>
    %5 = arith.subf %3, %4 : vector<16x128xf32>
    %6 = vector.shape_cast %5 : vector<16x128xf32> to vector<2x8x128xf32>
    %c0_4 = arith.constant 0 : index
    %c0_5 = arith.constant 0 : index
    %c0_6 = arith.constant 0 : index
    %7 = vector.load %arg4[%c0_4, %c0_5, %c0_6] : memref<2x8x128xf32, #tpu.memory_space<vmem>>, vector<1x8x128xf32>
    %8 = vector.shape_cast %7 : vector<1x8x128xf32> to vector<8x128xf32>
    %9 = arith.mulf %6, %6 : vector<2x8x128xf32>
    %cst = arith.constant dense<0.000000e+00> : vector<8x128xf32>
    %10 = vector.multi_reduction <add>, %9, %cst [0] : vector<2x8x128xf32> to vector<8x128xf32>
    %11 = arith.addf %8, %10 : vector<8x128xf32>
    %c0_7 = arith.constant 0 : index
    %c0_8 = arith.constant 0 : index
    %c0_9 = arith.constant 0 : index
    %12 = vector.load %arg4[%c0_7, %c0_8, %c0_9] : memref<2x8x128xf32, #tpu.memory_space<vmem>>, vector<1x8x128xf32>
    %13 = vector.shape_cast %12 : vector<1x8x128xf32> to vector<8x128xf32>
    %14 = vector.shape_cast %11 : vector<8x128xf32> to vector<1x8x128xf32>
    tpu.vector_store %arg4[%c0_7, %c0_8, %c0_9], %14 {strides = array<i32>} : memref<2x8x128xf32, #tpu.memory_space<vmem>>, vector<1x8x128xf32>,
    %c1 = arith.constant 1 : index
    %c0_10 = arith.constant 0 : index
    %c0_11 = arith.constant 0 : index
    %15 = vector.load %arg4[%c1, %c0_10, %c0_11] : memref<2x8x128xf32, #tpu.memory_space<vmem>>, vector<1x8x128xf32>
    %16 = vector.shape_cast %15 : vector<1x8x128xf32> to vector<8x128xf32>
    %17 = math.absf %6 : vector<2x8x128xf32>
    %cst_12 = arith.constant dense<0.000000e+00> : vector<8x128xf32>
    %18 = vector.multi_reduction <add>, %17, %cst_12 [0] : vector<2x8x128xf32> to vector<8x128xf32>
    %19 = arith.addf %16, %18 : vector<8x128xf32>
    %c1_13 = arith.constant 1 : index
    %c0_14 = arith.constant 0 : index
    %c0_15 = arith.constant 0 : index
    %20 = vector.load %arg4[%c1_13, %c0_14, %c0_15] : memref<2x8x128xf32, #tpu.memory_space<vmem>>, vector<1x8x128xf32>
    %21 = vector.shape_cast %20 : vector<1x8x128xf32> to vector<8x128xf32>
    %22 = vector.shape_cast %19 : vector<8x128xf32> to vector<1x8x128xf32>
    tpu.vector_store %arg4[%c1_13, %c0_14, %c0_15], %22 {strides = array<i32>} : memref<2x8x128xf32, #tpu.memory_space<vmem>>, vector<1x8x128xf32>,
    return
  }
  func.func @transform_0(%arg0: i32, %arg1: i32) -> (i32, i32) {
    %c1_i32 = arith.constant 1 : i32
    %0 = arith.muli %arg0, %c1_i32 : i32
    %1 = arith.addi %0, %arg1 : i32
    %c0_i32 = arith.constant 0 : i32
    %c0_i32_0 = arith.constant 0 : i32
    return %1, %c0_i32 : i32, i32
  }
  func.func @transform_1(%arg0: i32, %arg1: i32) -> (i32, i32) {
    %c1_i32 = arith.constant 1 : i32
    %0 = arith.muli %arg0, %c1_i32 : i32
    %1 = arith.addi %0, %arg1 : i32
    %c0_i32 = arith.constant 0 : i32
    %c0_i32_0 = arith.constant 0 : i32
    return %1, %c0_i32 : i32, i32
  }
  func.func @transform_2(%arg0: i32, %arg1: i32) -> (i32, i32, i32) {
    %c0_i32 = arith.constant 0 : i32
    %c0_i32_0 = arith.constant 0 : i32
    %c0_i32_1 = arith.constant 0 : i32
    return %arg0, %c0_i32, %c0_i32_0 : i32, i32, i32
  }
}

</mosaic_0001>

<llo_original>
// kernel: tpu_custom_call.1
$region0: #{tpu_custom_call.1}
  #allocation0 [shape = 'u32[]', space=smem, size = 0x4, offset = 0x4, fixed_abs, tag = 'smem constant byte address 0x4 - core index']
  #allocation1 [shape = 'u32[144,128]{1,0:T(1,128)}', space=vmem, size = 0x12000, scoped, tag = 'internal scratch']
  %s0 = inlined_call_operand.hbm [shape: f32[16,128], index: 0, kind: input, shape index: {}]
  %s1 = inlined_call_operand.hbm [shape: f32[16,128], index: 1, kind: input, shape index: {}]
  %s2 = inlined_call_operand.hbm [shape: f32[2,8,128], index: 2, kind: output, shape index: {}]
  %s3 = sld [smem:[#allocation0]]
  $region30: #{tpu_custom_call.1} parent=0
    _
  %s5 = ssub.s32 1, %s3
  %s6 = scalar_select 0, %s5, %s3
  $region1: #{tpu_custom_call.1} parent=0
    #allocation2 [shape = 'u8[8192]{0}', space=vmem, size = 0x2000, scoped, tag = 'input window, operand 0, single buffered']
    #allocation3 [shape = 's32[1]{0}', space=sflag, size = 0x4, scoped, tag = 'scoped memory for tpu_custom_call.1']
    #allocation4 [shape = 's32[1]{0}', space=sflag, size = 0x4, scoped, tag = 'scoped memory for tpu_custom_call.1']
    #allocation5 [shape = 'u8[8192]{0}', space=vmem, size = 0x2000, scoped, tag = 'input window, operand 1, single buffered']
    #allocation6 [shape = 's32[1]{0}', space=sflag, size = 0x4, scoped, tag = 'scoped memory for tpu_custom_call.1']
    #allocation7 [shape = 'u8[8192]{0}', space=vmem, size = 0x2000, scoped, tag = 'output window, operand 0, single buffered']
    %7 = vsyncpa [#allocation3], 0
    %8 = vsyncpa [#allocation6], 0
    %9 = vsyncpa [#allocation4], 0
    // Predicated region
    $region2: #{tpu_custom_call.1} parent=1 // pred_check
      _
    $region3: #{tpu_custom_call.1} parent=1 // pred_check_branch
      %11 = sbr.rel (0) target = $region5
    $region4: #{tpu_custom_call.1} parent=1 // pred_region
      %s12 = sadd.s32 0, 0
      %s13 = smul.u32 2, %s12
      %s15 = ssub.s32 256, 256
      %16 = vsyncadd [#allocation3], %s15
      %s17 = smul.addr %s13, 128
      %s18 = scalar_lea.hbm %s0, %s17
      %s19 = sshll.u32 [#allocation2], 4
      %s20 = int_to_ptr.vmem [resolvable:$true] %s19
      %25 = dma.hbm_to_vmem [thread:$0]  %s18, 256, %s20, [#allocation3], 128, 128, 8
    $region5: #{tpu_custom_call.1} parent=1 // pred_fallthru
      _
    // Predicated region
    $region6: #{tpu_custom_call.1} parent=1 // pred_check
      _
    $region7: #{tpu_custom_call.1} parent=1 // pred_check_branch
      %27 = sbr.rel (0) target = $region9
    $region8: #{tpu_custom_call.1} parent=1 // pred_region
      %s28 = sadd.s32 0, 0
      %s29 = smul.u32 2, %s28
      %s31 = ssub.s32 256, 256
      %32 = vsyncadd [#allocation6], %s31
      %s33 = smul.addr %s29, 128
      %s34 = scalar_lea.hbm %s1, %s33
      %s35 = sshll.u32 [#allocation5], 4
      %s36 = int_to_ptr.vmem [resolvable:$true] %s35
      %41 = dma.hbm_to_vmem [thread:$0]  %s34, 256, %s36, [#allocation6], 128, 128, 8
    $region9: #{tpu_custom_call.1} parent=1 // pred_fallthru
      _
    // Predicated region
    $region10: #{tpu_custom_call.1} parent=1 // pred_check
      _
    $region11: #{tpu_custom_call.1} parent=1 // pred_check_branch
      %43 = sbr.rel (0) target = $region13
    $region12: #{tpu_custom_call.1} parent=1 // pred_region
      %44 = dma.done [#allocation3], 256
    $region13: #{tpu_custom_call.1} parent=1 // pred_fallthru
      _
    // Predicated region
    $region14: #{tpu_custom_call.1} parent=1 // pred_check
      _
    $region15: #{tpu_custom_call.1} parent=1 // pred_check_branch
      %46 = sbr.rel (0) target = $region17
    $region16: #{tpu_custom_call.1} parent=1 // pred_region
      %47 = dma.done [#allocation6], 256
    $region17: #{tpu_custom_call.1} parent=1 // pred_fallthru
      _
    %s48 = sadd.s32 0, 0
    %s49 = smul.u32 2, %s48
    %s50 = sadd.s32 0, 0
    %s51 = smul.u32 2, %s50
    %p52 = scmp.eq.s32.totalorder 0, 0
    // Predicated region
    $region18: #{tpu_custom_call.1} parent=1 // pred_check
      %p53 = pneg %p52
    $region19: #{tpu_custom_call.1} parent=1 // pred_check_branch
      %55 = sbr.rel (%p53) target = $region21
    $region20: #{tpu_custom_call.1} parent=1 // pred_region
      %56 = vst [vmem:[#allocation7] sm:$0xff] 0.0
      %57 = vst [vmem:[#allocation7 + $0x8] sm:$0xff] 0.0
    $region21: #{tpu_custom_call.1} parent=1 // pred_fallthru
      _
    %v58 = vld [vmem:[#allocation2] sm:$0xff]
    %v59 = vld [vmem:[#allocation2 + $0x8] sm:$0xff]
    %v60 = vld [vmem:[#allocation5] sm:$0xff]
    %v61 = vld [vmem:[#allocation5 + $0x8] sm:$0xff]
    %v62 = vsub.f32 %v58, %v60
    %v63 = vsub.f32 %v59, %v61
    %v64 = vld [vmem:[#allocation7] sm:$0xff]
    %v65 = vmul.f32 %v62, %v62
    %v66 = vmul.f32 %v63, %v63
    %v67 = vadd.f32 %v65, %v66
    %v68 = vadd.f32 %v64, %v67
    %69 = vst [vmem:[#allocation7] sm:$0xff] %v68
    %s70 = scalar_lea.vmem [#allocation7], 8
    %v71 = vld [vmem:[%s70] sm:$0xff]
    %v72 = vand.u32 2147483647, %v62
    %v73 = vand.u32 2147483647, %v63
    %v74 = vadd.f32 %v72, %v73
    %v75 = vadd.f32 %v71, %v74
    %76 = vst [vmem:[%s70] sm:$0xff] %v75
    // Predicated region
    $region22: #{tpu_custom_call.1} parent=1 // pred_check
      _
    $region23: #{tpu_custom_call.1} parent=1 // pred_check_branch
      %78 = sbr.rel (0) target = $region25
    $region24: #{tpu_custom_call.1} parent=1 // pred_region
      %s80 = ssub.s32 256, 256
      %81 = vsyncadd [#allocation4], %s80
      %s82 = sshll.u32 [#allocation7], 4
      %s83 = int_to_ptr.vmem [resolvable:$true] %s82
      %88 = dma.vmem_to_hbm [thread:$0]  %s83, 256, %s2, [#allocation4], 128, 128, 8
    $region25: #{tpu_custom_call.1} parent=1 // pred_fallthru
      _
    // Predicated region
    $region26: #{tpu_custom_call.1} parent=1 // pred_check
      _
    $region27: #{tpu_custom_call.1} parent=1 // pred_check_branch
      %90 = sbr.rel (0) target = $region29
    $region28: #{tpu_custom_call.1} parent=1 // pred_region
      %91 = dma.done [#allocation4], 256
    $region29: #{tpu_custom_call.1} parent=1 // pred_fallthru
      _
    %92 = vsyncpa [#allocation3], 1
    %93 = vsyncpa [#allocation6], 1
    %94 = vsyncpa [#allocation4], 1

</llo_original>
